<compile_context>
chip_gen: v7x
topology: tpu7x:2x2x1
jax: 0.10.0
libtpu: 0.0.40
codegen_flags: <defaults>
</compile_context>

<pallas_src>
import jax
import jax.numpy as jnp
from jax.experimental import pallas as pl
from jax.experimental.pallas import tpu as pltpu

_NEG_SLOPE = 0.2  # LeakyReLU negative slope from the PyTorch module.


def _round_up(x, m):
    return ((x + m - 1) // m) * m


def _default_final_on_mxu():
    """Prefer the MXU final layer on v6e/v7x; keep the VPU reduce path on v5e."""
    try:
        kind = jax.devices()[0].device_kind.lower()
        return not ("v5e" in kind or "v5 lite" in kind or "v5litepod" in kind)
    except Exception:
        return True


def _make_critic_kernel(num_mid_layers, final_on_mxu, compute_dtype):
    """Fused critic MLP kernel.

    Ref order:
      spectra (TB, S), labels (TB, L),
      w0_spec (S, H0), w0_lab (L, H0), b0 (1, H0),
      [w_i (H_{i-1}, H_i), b_i (1, H_i)]  for each middle hidden block,
      w_last, b_last,
      out (TB, out_dim)
    """

    def leaky_relu(h):
        # maximum form: 2 VALU ops per vreg instead of 3 (cmp + mul + select);
        # exactly equivalent to LeakyReLU for slope in (0, 1).
        return jnp.maximum(h, _NEG_SLOPE * h)

    def kernel(*refs):
        spec_ref, lab_ref = refs[0], refs[1]
        out_ref = refs[-1]
        p = refs[2:-1]

        # Layer 0: torch.cat fused into the kernel via split weights:
        #   cat([s, l], 1) @ W0 == s @ W0[:S] + l @ W0[S:]
        h = (
            jnp.dot(spec_ref[...], p[0][...], preferred_element_type=jnp.float32)
            + jnp.dot(lab_ref[...], p[1][...], preferred_element_type=jnp.float32)
            + p[2][...]
        )
        # Dropout(0.2) is identity at inference; LeakyReLU(0.2).
        h = leaky_relu(h).astype(compute_dtype)

        # Middle hidden blocks (MXU matmuls; weights stay VMEM-resident across
        # batch tiles because their block index is constant).
        idx = 3
        for _ in range(num_mid_layers):
            w = p[idx][...]
            b = p[idx + 1][...]
            idx += 2
            h = jnp.dot(h, w, preferred_element_type=jnp.float32) + b
            h = leaky_relu(h).astype(compute_dtype)

        # Final Linear.
        w_last = p[idx][...]
        b_last = p[idx + 1][...]
        if final_on_mxu:
            # N=1 matmul on the (otherwise idle) MXU — preferred on v6e/v7x.
            out = jnp.dot(h, w_last, preferred_element_type=jnp.float32) + b_last
        else:
            # VPU multiply + lane reduction; w_last stored as a (1, H) row.
            out = (
                jnp.sum(h.astype(jnp.float32) * w_last, axis=-1, keepdims=True)
                + b_last
            )
        out_ref[...] = out.astype(out_ref.dtype)

    return kernel


def init_critic_params(key, input_dim, hidden_dims, output_dim):
    """Deterministic params matching Critic.make_critic layer shapes."""
    dims = [input_dim] + list(hidden_dims)
    layer_shapes = [(dims[i], dims[i + 1]) for i in range(len(dims) - 2)]
    layer_shapes.append((dims[-2], output_dim))
    params = []
    for fan_in, fan_out in layer_shapes:
        key, kw, kb = jax.random.split(key, 3)
        bound = 1.0 / (fan_in ** 0.5)  # PyTorch nn.Linear default init range
        w = jax.random.uniform(kw, (fan_in, fan_out), jnp.float32, -bound, bound)
        b = jax.random.uniform(kb, (1, fan_out), jnp.float32, -bound, bound)
        params.append((w, b))
    return params


def prepare_critic_params(params, spec_dim, *, final_on_mxu=None,
                          compute_dtype=jnp.float32):
    """One-time host-side prep (tiny, off the hot path):
    - split W0 along its input rows into spectra / labels halves (fused concat),
    - choose the final-layer path (MXU matmul vs VPU reduce) and store w_last
      in the matching layout,
    - optionally cast mid/final weights to bf16 for the v6e/v7x bf16 path
      (layer-0 weights and all biases stay f32: layer-0 inputs and all
      accumulations are f32).
    """
    assert len(params) >= 2, "need at least one hidden block + the final layer"
    w_last, b_last = params[-1]
    out_dim = w_last.shape[1]
    if final_on_mxu is None:
        final_on_mxu = _default_final_on_mxu()
    if out_dim != 1:
        final_on_mxu = True  # reduce path only implements out_dim == 1

    w0, b0 = params[0]
    flat = [w0[:spec_dim], w0[spec_dim:], b0]
    for w, b in params[1:-1]:
        flat.extend([w.astype(compute_dtype), b])
    if final_on_mxu:
        flat.extend([w_last.astype(compute_dtype), b_last])
    else:
        flat.extend([w_last.reshape(1, -1), b_last])  # (H,1) -> (1,H) f32 row

    meta = dict(
        num_layers=len(params),
        final_on_mxu=final_on_mxu,
        out_dim=out_dim,
        compute_dtype=compute_dtype,
    )
    return flat, meta


def critic_forward(spectra, labels, prepared, *, block_batch=8192):
    flat_params, meta = prepared
    out_dim = meta["out_dim"]

    # Input streaming is the only HBM traffic that scales with batch: keep
    # f32/bf16 inputs as-is (no extra host cast pass); widen anything else.
    def _as_mxu_input(x):
        if x.dtype in (jnp.float32, jnp.bfloat16):
            return x
        return x.astype(jnp.float32)

    spectra = _as_mxu_input(spectra)
    labels = _as_mxu_input(labels)
    batch, spec_dim = spectra.shape
    lab_dim = labels.shape[1]

    # Batch tile: large enough to amortize the ~0.35us/step pipeline overhead,
    # but never a single tile for mid-size batches so the "parallel" axis can
    # shard across v7x's 2 TensorCores; always a multiple of 8 (sublanes).
    tb = min(block_batch, _round_up(pl.cdiv(batch, 2), 8))
    tb = max(8, min(tb, _round_up(batch, 8)))
    grid = (pl.cdiv(batch, tb),)

    def row_spec(feat):
        # TODO(synk): add pipeline_mode=pl.Buffered(3) here only if a trace
        # shows DMA exposed at step boundaries after enlarging the tile.
        return pl.BlockSpec((tb, feat), lambda i: (i, 0))

    def resident_spec(arr):
        # Constant block index -> DMA'd once, stays VMEM-resident across tiles.
        return pl.BlockSpec(arr.shape, lambda i: (0, 0))

    # Explicit VMEM budget: double-buffered input/output row blocks + a handful
    # of live (tb, H) f32 temporaries + resident params (x2 headroom).  Capped
    # at 64 MiB (safe under v7x physical VMEM), floored at 32 MiB (lifts v5e's
    # 16 MiB scoped default).
    in_bytes = spectra.dtype.itemsize
    max_width = max(int(p.shape[-1]) for p in flat_params)
    budget = (
        2 * 2 * tb * (spec_dim + lab_dim) * in_bytes   # double-buffered inputs
        + 2 * tb * out_dim * 4                          # double-buffered output
        + 4 * tb * max_width * 4                        # live activation temporaries
        + 2 * sum(int(p.size) * p.dtype.itemsize for p in flat_params)
    )
    vmem_limit = int(min(max(2 * budget, 32 << 20), 64 << 20))

    kernel = _make_critic_kernel(
        meta["num_layers"] - 2, meta["final_on_mxu"], meta["compute_dtype"]
    )
    out = pl.pallas_call(
        kernel,
        out_shape=jax.ShapeDtypeStruct((batch, out_dim), jnp.float32),
        grid=grid,
        in_specs=[row_spec(spec_dim), row_spec(lab_dim)]
        + [resident_spec(p) for p in flat_params],
        # Note: (tb, 1) column output is lane-sparse; a lane-dense (1, tb) row
        # layout is only worth it on v5e if the store slot shows up saturated.
        out_specs=pl.BlockSpec((tb, out_dim), lambda i: (i, 0)),
        compiler_params=pltpu.CompilerParams(
            # Independent batch tiles -> shardable across v7x's 2 TensorCores.
            dimension_semantics=("parallel",),
            vmem_limit_bytes=vmem_limit,
        ),
    )(spectra, labels, *flat_params)

    # validity.view(len(validity), -1)
    return out.reshape(batch, -1)


def _reference_forward(spectra, labels, params):
    """Pure-JAX reference matching the PyTorch forward (concat + Linear chain)."""
    h = jnp.concatenate(
        [spectra.astype(jnp.float32), labels.astype(jnp.float32)], axis=1
    )
    for i, (w, b) in enumerate(params):
        h = h @ w + b
        if i < len(params) - 1:
            h = jnp.where(h > 0, h, _NEG_SLOPE * h)
    return h.reshape(h.shape[0], -1)


if __name__ == "__main__":
    key = jax.random.PRNGKey(0)
    k_spec, k_lab, k_par = jax.random.split(key, 3)

    batch = 8
    spec_dim, label_dim = 24, 8
    input_dim = spec_dim + label_dim        # bands + labels
    hidden_dims = [64, 32]                  # last hidden dim unused (as in PyTorch code)
    output_dim = 1

    spectra = jax.random.normal(k_spec, (batch, spec_dim), jnp.float32)
    labels = jax.random.normal(k_lab, (batch, label_dim), jnp.float32)
    params = init_critic_params(k_par, input_dim, hidden_dims, output_dim)
    ref = _reference_forward(spectra, labels, params)

    # f32, final layer on the MXU (preferred path on v6e/v7x).
    prep_mxu = prepare_critic_params(params, spec_dim, final_on_mxu=True)
    out_mxu = jax.block_until_ready(critic_forward(spectra, labels, prep_mxu))
    assert out_mxu.shape == (batch, output_dim), out_mxu.shape
    assert jnp.allclose(out_mxu, ref, atol=1e-5, rtol=1e-5), "MXU-final mismatch"

    # f32, VPU-mul + lane-reduce final layer (v5e fallback path).
    prep_red = prepare_critic_params(params, spec_dim, final_on_mxu=False)
    out_red = jax.block_until_ready(critic_forward(spectra, labels, prep_red))
    assert jnp.allclose(out_red, ref, atol=1e-5, rtol=1e-5), "reduce-final mismatch"

    # bf16 compute path (v6e/v7x option) — relaxed tolerance, f32 accumulation.
    prep_bf16 = prepare_critic_params(
        params, spec_dim, final_on_mxu=True, compute_dtype=jnp.bfloat16
    )
    out_bf16 = jax.block_until_ready(critic_forward(spectra, labels, prep_bf16))
    assert jnp.allclose(out_bf16, ref, atol=5e-2, rtol=5e-2), "bf16 path mismatch"

    print("KERNEL_OK")
</pallas_src>

<mosaic_0001>
module attributes {stable_mosaic.version = 11 : i64} {
  func.func @kernel(%arg0: i32, %arg1: memref<8x24xf32, #tpu.memory_space<vmem>>, %arg2: memref<8x8xf32, #tpu.memory_space<vmem>>, %arg3: memref<24x64xf32, #tpu.memory_space<vmem>>, %arg4: memref<8x64xf32, #tpu.memory_space<vmem>>, %arg5: memref<1x64xf32, #tpu.memory_space<vmem>>, %arg6: memref<64x1xf32, #tpu.memory_space<vmem>>, %arg7: memref<1x1xf32, #tpu.memory_space<vmem>>, %arg8: memref<8x1xf32, #tpu.memory_space<vmem>>) attributes {dimension_semantics = [#tpu.dimension_semantics<parallel>], iteration_bounds = array<i64: 1>, scalar_prefetch = 0 : i64, scratch_operands = 0 : i64, tpu.core_type = #tpu.core_type<tc>, window_params = [{transform_indices = @transform_0, window_bounds = array<i64: 8, 24>}, {transform_indices = @transform_1, window_bounds = array<i64: 8, 8>}, {pipeline_mode = #tpu.pipeline_mode<synchronous>, transform_indices = @transform_2, window_bounds = array<i64: 24, 64>}, {pipeline_mode = #tpu.pipeline_mode<synchronous>, transform_indices = @transform_3, window_bounds = array<i64: 8, 64>}, {pipeline_mode = #tpu.pipeline_mode<synchronous>, transform_indices = @transform_4, window_bounds = array<i64: 1, 64>}, {pipeline_mode = #tpu.pipeline_mode<synchronous>, transform_indices = @transform_5, window_bounds = array<i64: 64, 1>}, {pipeline_mode = #tpu.pipeline_mode<synchronous>, transform_indices = @transform_6, window_bounds = array<i64: 1, 1>}, {transform_indices = @transform_7, window_bounds = array<i64: 8, 1>}]} {
    %c0 = arith.constant 0 : index
    %c0_0 = arith.constant 0 : index
    %0 = vector.load %arg1[%c0, %c0_0] : memref<8x24xf32, #tpu.memory_space<vmem>>, vector<8x24xf32>
    %c0_1 = arith.constant 0 : index
    %c0_2 = arith.constant 0 : index
    %1 = vector.load %arg3[%c0_1, %c0_2] : memref<24x64xf32, #tpu.memory_space<vmem>>, vector<24x64xf32>
    %cst = arith.constant dense<0.000000e+00> : vector<8x64xf32>
    %2 = tpu.matmul %0, %1, %cst {dimension_numbers = #tpu.dot_dimension_numbers<[1], [0], [0], [1], [0, 0, 1, 1], [], []>} : vector<8x24xf32>, vector<24x64xf32>, vector<8x64xf32> -> vector<8x64xf32>
    %c0_3 = arith.constant 0 : index
    %c0_4 = arith.constant 0 : index
    %3 = vector.load %arg2[%c0_3, %c0_4] : memref<8x8xf32, #tpu.memory_space<vmem>>, vector<8x8xf32>
    %c0_5 = arith.constant 0 : index
    %c0_6 = arith.constant 0 : index
    %4 = vector.load %arg4[%c0_5, %c0_6] : memref<8x64xf32, #tpu.memory_space<vmem>>, vector<8x64xf32>
    %cst_7 = arith.constant dense<0.000000e+00> : vector<8x64xf32>
    %5 = tpu.matmul %3, %4, %cst_7 {dimension_numbers = #tpu.dot_dimension_numbers<[1], [0], [0], [1], [0, 0, 1, 1], [], []>} : vector<8x8xf32>, vector<8x64xf32>, vector<8x64xf32> -> vector<8x64xf32>
    %6 = arith.addf %2, %5 : vector<8x64xf32>
    %c0_8 = arith.constant 0 : index
    %c0_9 = arith.constant 0 : index
    %7 = vector.load %arg5[%c0_8, %c0_9] : memref<1x64xf32, #tpu.memory_space<vmem>>, vector<1x64xf32>
    %8 = vector.broadcast %7 : vector<1x64xf32> to vector<8x64xf32>
    %9 = arith.addf %6, %8 : vector<8x64xf32>
    %cst_10 = arith.constant 2.000000e-01 : f32
    %10 = vector.broadcast %cst_10 : f32 to vector<8x64xf32>
    %11 = arith.mulf %10, %9 : vector<8x64xf32>
    %12 = arith.maximumf %9, %11 : vector<8x64xf32>
    %c0_11 = arith.constant 0 : index
    %c0_12 = arith.constant 0 : index
    %13 = vector.load %arg6[%c0_11, %c0_12] : memref<64x1xf32, #tpu.memory_space<vmem>>, vector<64x1xf32>
    %c0_13 = arith.constant 0 : index
    %c0_14 = arith.constant 0 : index
    %14 = vector.load %arg7[%c0_13, %c0_14] : memref<1x1xf32, #tpu.memory_space<vmem>>, vector<1x1xf32>
    %cst_15 = arith.constant dense<0.000000e+00> : vector<8x1xf32>
    %15 = tpu.matmul %12, %13, %cst_15 {dimension_numbers = #tpu.dot_dimension_numbers<[1], [0], [0], [1], [0, 0, 1, 1], [], []>} : vector<8x64xf32>, vector<64x1xf32>, vector<8x1xf32> -> vector<8x1xf32>
    %16 = vector.broadcast %14 : vector<1x1xf32> to vector<8x1xf32>
    %17 = arith.addf %15, %16 : vector<8x1xf32>
    %c0_16 = arith.constant 0 : index
    %c0_17 = arith.constant 0 : index
    %18 = vector.load %arg8[%c0_16, %c0_17] : memref<8x1xf32, #tpu.memory_space<vmem>>, vector<8x1xf32>
    tpu.vector_store %arg8[%c0_16, %c0_17], %17 {strides = array<i32>} : memref<8x1xf32, #tpu.memory_space<vmem>>, vector<8x1xf32>,
    return
  }
  func.func @transform_0(%arg0: i32) -> (i32, i32) {
    %c0_i32 = arith.constant 0 : i32
    %c0_i32_0 = arith.constant 0 : i32
    return %arg0, %c0_i32 : i32, i32
  }
  func.func @transform_1(%arg0: i32) -> (i32, i32) {
    %c0_i32 = arith.constant 0 : i32
    %c0_i32_0 = arith.constant 0 : i32
    return %arg0, %c0_i32 : i32, i32
  }
  func.func @transform_2(%arg0: i32) -> (i32, i32) {
    %c0_i32 = arith.constant 0 : i32
    %c0_i32_0 = arith.constant 0 : i32
    %c0_i32_1 = arith.constant 0 : i32
    return %c0_i32, %c0_i32_0 : i32, i32
  }
  func.func @transform_3(%arg0: i32) -> (i32, i32) {
    %c0_i32 = arith.constant 0 : i32
    %c0_i32_0 = arith.constant 0 : i32
    %c0_i32_1 = arith.constant 0 : i32
    return %c0_i32, %c0_i32_0 : i32, i32
  }
  func.func @transform_4(%arg0: i32) -> (i32, i32) {
    %c0_i32 = arith.constant 0 : i32
    %c0_i32_0 = arith.constant 0 : i32
    %c0_i32_1 = arith.constant 0 : i32
    return %c0_i32, %c0_i32_0 : i32, i32
  }
  func.func @transform_5(%arg0: i32) -> (i32, i32) {
    %c0_i32 = arith.constant 0 : i32
    %c0_i32_0 = arith.constant 0 : i32
    %c0_i32_1 = arith.constant 0 : i32
    return %c0_i32, %c0_i32_0 : i32, i32
  }
  func.func @transform_6(%arg0: i32) -> (i32, i32) {
    %c0_i32 = arith.constant 0 : i32
    %c0_i32_0 = arith.constant 0 : i32
    %c0_i32_1 = arith.constant 0 : i32
    return %c0_i32, %c0_i32_0 : i32, i32
  }
  func.func @transform_7(%arg0: i32) -> (i32, i32) {
    %c0_i32 = arith.constant 0 : i32
    %c0_i32_0 = arith.constant 0 : i32
    return %arg0, %c0_i32 : i32, i32
  }
}

</mosaic_0001>

<llo_original>
// kernel: tpu_custom_call.1
$region0: #{tpu_custom_call.1}
  #allocation0 [shape = 'u32[]', space=smem, size = 0x4, offset = 0x4, fixed_abs, tag = 'smem constant byte address 0x4 - core index']
  #allocation1 [shape = 'u32[144,128]{1,0:T(1,128)}', space=vmem, size = 0x12000, scoped, tag = 'internal scratch']
  #allocation2 [shape = 'f32[1,1]{1,0:T(1,128)S(1)}', space=vmem, size = 0x200, scoped, tag = 'scoped memory for tpu_custom_call.1']
  %s0 = inlined_call_operand.vmem [shape: f32[8,24], index: 0, kind: input, shape index: {}]
  %s1 = inlined_call_operand.vmem [shape: f32[8,8], index: 1, kind: input, shape index: {}]
  %s2 = inlined_call_operand.vmem [shape: f32[24,64], index: 2, kind: input, shape index: {}]
  %s3 = inlined_call_operand.vmem [shape: f32[8,64], index: 3, kind: input, shape index: {}]
  %s4 = inlined_call_operand.vmem [shape: f32[1,64], index: 4, kind: input, shape index: {}]
  %s5 = inlined_call_operand.vmem [shape: f32[64,1], index: 5, kind: input, shape index: {}]
  %s6 = inlined_call_operand.<no memory space> [shape: f32[1,1], index: 6, kind: input, shape index: {}]
  %s7 = inlined_call_operand.vmem [shape: f32[8,1], index: 7, kind: output, shape index: {}]
  %s8 = sld [smem:[#allocation0]]
  $region38: #{tpu_custom_call.1} parent=0
    _
  %s10 = ssub.s32 1, %s8
  %s11 = scalar_select 0, %s10, %s8
  %v12 = vstv %s6
  %13 = vst [vmem:[#allocation2] sm:$0x1] %v12
  // Predicated region
  $region2: #{tpu_custom_call.1} parent=0 // pred_check
    _
  $region3: #{tpu_custom_call.1} parent=0 // pred_check_branch
    %15 = sbr.rel (0) target = $region5
  $region4: #{tpu_custom_call.1} parent=0 // pred_region
    _
  $region5: #{tpu_custom_call.1} parent=0 // pred_fallthru
    _
  // Predicated region
  $region6: #{tpu_custom_call.1} parent=0 // pred_check
    _
  $region7: #{tpu_custom_call.1} parent=0 // pred_check_branch
    %17 = sbr.rel (0) target = $region9
  $region8: #{tpu_custom_call.1} parent=0 // pred_region
    _
  $region9: #{tpu_custom_call.1} parent=0 // pred_fallthru
    _
  // Predicated region
  $region10: #{tpu_custom_call.1} parent=0 // pred_check
    _
  $region11: #{tpu_custom_call.1} parent=0 // pred_check_branch
    %19 = sbr.rel (0) target = $region13
  $region12: #{tpu_custom_call.1} parent=0 // pred_region
    _
  $region13: #{tpu_custom_call.1} parent=0 // pred_fallthru
    _
  // Predicated region
  $region14: #{tpu_custom_call.1} parent=0 // pred_check
    _
  $region15: #{tpu_custom_call.1} parent=0 // pred_check_branch
    %21 = sbr.rel (0) target = $region17
  $region16: #{tpu_custom_call.1} parent=0 // pred_region
    _
  $region17: #{tpu_custom_call.1} parent=0 // pred_fallthru
    _
  // Predicated region
  $region18: #{tpu_custom_call.1} parent=0 // pred_check
    _
  $region19: #{tpu_custom_call.1} parent=0 // pred_check_branch
    %23 = sbr.rel (0) target = $region21
  $region20: #{tpu_custom_call.1} parent=0 // pred_region
    _
  $region21: #{tpu_custom_call.1} parent=0 // pred_fallthru
    _
  // Predicated region
  $region22: #{tpu_custom_call.1} parent=0 // pred_check
    _
  $region23: #{tpu_custom_call.1} parent=0 // pred_check_branch
    %25 = sbr.rel (0) target = $region25
  $region24: #{tpu_custom_call.1} parent=0 // pred_region
    _
  $region25: #{tpu_custom_call.1} parent=0 // pred_fallthru
    _
  // Predicated region
  $region26: #{tpu_custom_call.1} parent=0 // pred_check
    _
  $region27: #{tpu_custom_call.1} parent=0 // pred_check_branch
    %27 = sbr.rel (0) target = $region29
  $region28: #{tpu_custom_call.1} parent=0 // pred_region
    _
  $region29: #{tpu_custom_call.1} parent=0 // pred_fallthru
    _
  %v28 = vld [vmem:[%s0] sm:$0xff]
  %v29 = vld [vmem:[%s2] sm:$0xff]
  %v30 = vld [vmem:[%s2 + $0x8] sm:$0xff]
  %v31 = vld [vmem:[%s2 + $0x10] sm:$0xff]
  %v32 = vld [vmem:[%s1] sm:$0xff]
  %v33 = vld [vmem:[%s3] sm:$0xff]
  %vm34 = vcmask 64512
  %v36 = vsel %vm34, %v32, 0
  %38 = vmatprep.subr.mxu0 0.0
  %39 = vmatpush1.msra.mxu0 %v33
  %40 = vmatprep.subr.mxu0 0.0
  %41 = vmatpush1.msra.mxu0 0.0
  %42 = vmatprep.subr.mxu0 0.0
  %43 = vmatpush1.msra.mxu0 0.0
  %44 = vmatprep.subr.mxu0 0.0
  %45 = vmatpush1.msra.mxu0 0.0
  %46 = vmatprep.subr.mxu0 0.0
  %47 = vmatpush1.msra.mxu0 0.0
  %48 = vmatprep.subr.mxu0 0.0
  %49 = vmatpush1.msra.mxu0 0.0
  %50 = vmatprep.subr.mxu0 0.0
  %51 = vmatpush1.msra.mxu0 0.0
  %52 = vmatprep.subr.mxu0 0.0
  %53 = vmatpush1.msra.mxu0 0.0
  %54 = vmatprep.subr.mxu0 0.0
  %55 = vmatpush1.msra.mxu0 0.0
  %56 = vmatprep.subr.mxu0 0.0
  %57 = vmatpush1.msra.mxu0 0.0
  %58 = vmatprep.subr.mxu0 0.0
  %59 = vmatpush1.msra.mxu0 0.0
  %60 = vmatprep.subr.mxu0 0.0
  %61 = vmatpush1.msra.mxu0 0.0
  %62 = vmatprep.subr.mxu0 0.0
  %63 = vmatpush1.msra.mxu0 0.0
  %64 = vmatprep.subr.mxu0 0.0
  %65 = vmatpush1.msra.mxu0 0.0
  %66 = vmatprep.subr.mxu0 0.0
  %67 = vmatpush1.msra.mxu0 0.0
  %68 = vmatprep.subr.mxu0 0.0
  %69 = vmatpush1.msra.mxu0 0.0
  %70 = vmatprep.subr.mxu0 0.0
  %71 = vmatpush1.msra.mxu0 0.0
  %72 = vmatprep.subr.mxu0 0.0
  %73 = vmatpush1.msra.mxu0 0.0
  %74 = vmatprep.subr.mxu0 0.0
  %75 = vmatpush1.msra.mxu0 0.0
  %76 = vmatprep.subr.mxu0 0.0
  %77 = vmatpush1.msra.mxu0 0.0
  %78 = vmatprep.subr.mxu0 0.0
  %79 = vmatpush1.msra.mxu0 0.0
  %80 = vmatprep.subr.mxu0 0.0
  %81 = vmatpush1.msra.mxu0 0.0
  %82 = vmatprep.subr.mxu0 0.0
  %83 = vmatpush1.msra.mxu0 0.0
  %84 = vmatprep.subr.mxu0 0.0
  %85 = vmatpush1.msra.mxu0 0.0
  %86 = vmatprep.subr.mxu0 0.0
  %87 = vmatpush1.msra.mxu0 0.0
  %88 = vmatprep.subr.mxu0 0.0
  %89 = vmatpush1.msra.mxu0 0.0
  %90 = vmatprep.subr.mxu0 0.0
  %91 = vmatpush1.msra.mxu0 0.0
  %92 = vmatprep.subr.mxu0 0.0
  %93 = vmatpush1.msra.mxu0 0.0
  %94 = vmatprep.subr.mxu0 0.0
  %95 = vmatpush1.msra.mxu0 0.0
  %96 = vmatprep.subr.mxu0 0.0
  %97 = vmatpush1.msra.mxu0 0.0
  %98 = vmatprep.subr.mxu0 0.0
  %99 = vmatpush1.msra.mxu0 0.0
  %100 = vmatprep.subr.mxu0 0.0
  %101 = vmatpush1.msra.mxu0 0.0
  %102 = vmatprep.mubr.f32.mxu0 0.0
  %103 = vmatmul.mubr.f32.gmra.mrb[0].mxu0 %v36
  %v104 = vpop.f32.mrb[0].mxu0
  %v105 = vadd.f32 0.0, %v104
  %v106 = vpop.f32.mrb[0].mxu0
  %107 = vdwg.mxu0
  %vm108 = vcmask 195584
  %v110 = vsel %vm108, %v28, 0
  %112 = vmatprep.subr.mxu0 0.0
  %113 = vmatpush1.msra.mxu0 %v29
  %114 = vmatprep.subr.mxu0 0.0
  %115 = vmatpush1.msra.mxu0 %v30
  %116 = vmatprep.subr.mxu0 0.0
  %117 = vmatpush1.msra.mxu0 %v31
  %118 = vmatprep.subr.mxu0 0.0
  %119 = vmatpush1.msra.mxu0 0.0
  %120 = vmatprep.subr.mxu0 0.0
  %121 = vmatpush1.msra.mxu0 0.0
  %122 = vmatprep.subr.mxu0 0.0
  %123 = vmatpush1.msra.mxu0 0.0
  %124 = vmatprep.subr.mxu0 0.0
  %125 = vmatpush1.msra.mxu0 0.0
  %126 = vmatprep.subr.mxu0 0.0
  %127 = vmatpush1.msra.mxu0 0.0
  %128 = vmatprep.subr.mxu0 0.0
  %129 = vmatpush1.msra.mxu0 0.0
  %130 = vmatprep.subr.mxu0 0.0
  %131 = vmatpush1.msra.mxu0 0.0
  %132 = vmatprep.subr.mxu0 0.0
  %133 = vmatpush1.msra.mxu0 0.0
  %134 = vmatprep.subr.mxu0 0.0
  %135 = vmatpush1.msra.mxu0 0.0
  %136 = vmatprep.subr.mxu0 0.0
  %137 = vmatpush1.msra.mxu0 0.0
  %138 = vmatprep.subr.mxu0 0.0
  %139 = vmatpush1.msra.mxu0 0.0
  %140 = vmatprep.subr.mxu0 0.0
  %141 = vmatpush1.msra.mxu0 0.0
  %142 = vmatprep.subr.mxu0 0.0
  %143 = vmatpush1.msra.mxu0 0.0
  %144 = vmatprep.subr.mxu0 0.0
  %145 = vmatpush1.msra.mxu0 0.0
  %146 = vmatprep.subr.mxu0 0.0
  %147 = vmatpush1.msra.mxu0 0.0
  %148 = vmatprep.subr.mxu0 0.0
  %149 = vmatpush1.msra.mxu0 0.0
  %150 = vmatprep.subr.mxu0 0.0
  %151 = vmatpush1.msra.mxu0 0.0
  %152 = vmatprep.subr.mxu0 0.0
  %153 = vmatpush1.msra.mxu0 0.0
  %154 = vmatprep.subr.mxu0 0.0
  %155 = vmatpush1.msra.mxu0 0.0
  %156 = vmatprep.subr.mxu0 0.0
  %157 = vmatpush1.msra.mxu0 0.0
  %158 = vmatprep.subr.mxu0 0.0
  %159 = vmatpush1.msra.mxu0 0.0
  %160 = vmatprep.subr.mxu0 0.0
  %161 = vmatpush1.msra.mxu0 0.0
  %162 = vmatprep.subr.mxu0 0.0
  %163 = vmatpush1.msra.mxu0 0.0
  %164 = vmatprep.subr.mxu0 0.0
  %165 = vmatpush1.msra.mxu0 0.0
  %166 = vmatprep.subr.mxu0 0.0
  %167 = vmatpush1.msra.mxu0 0.0
  %168 = vmatprep.subr.mxu0 0.0
  %169 = vmatpush1.msra.mxu0 0.0
  %170 = vmatprep.subr.mxu0 0.0
  %171 = vmatpush1.msra.mxu0 0.0
  %172 = vmatprep.subr.mxu0 0.0
  %173 = vmatpush1.msra.mxu0 0.0
  %174 = vmatprep.subr.mxu0 0.0
  %175 = vmatpush1.msra.mxu0 0.0
  %176 = vmatprep.mubr.f32.mxu0 0.0
  %177 = vmatmul.mubr.f32.gmra.mrb[0].mxu0 %v110
  %v178 = vpop.f32.mrb[0].mxu0
  %v179 = vadd.f32 %v105, %v178
  %v180 = vpop.f32.mrb[0].mxu0
  %181 = vdwg.mxu0
  %v182 = vld [vmem:[%s4] sm:$0x1]
  %v184 = vlaneseq
  %v185 = vshrl.u32 %v184, 7
  %v186 = vsub.s32 0, %v185
  %v187 = vrot.slane %v182, %v186
  %v189 = vadd.f32 %v179, %v187
  %v190 = vmul.f32 %v189, 0.2
  %v191 = vmax.f32 %v189, %v190
  %v192 = vld [vmem:[%s5] sm:$0xff]
  %v193 = vld [vmem:[%s5 + $0x8] sm:$0xff]
  %v194 = vld [vmem:[%s5 + $0x10] sm:$0xff]
  %v195 = vld [vmem:[%s5 + $0x18] sm:$0xff]
  %v196 = vld [vmem:[%s5 + $0x20] sm:$0xff]
  %v197 = vld [vmem:[%s5 + $0x28] sm:$0xff]
  %v198 = vld [vmem:[%s5 + $0x30] sm:$0xff]
  %v199 = vld [vmem:[%s5 + $0x38] sm:$0xff]
  %v200 = vld [vmem:[#allocation2] sm:$0x1]
  %v202 = vlaneseq
  %v203 = vshrl.u32 %v202, 7
  %v204 = vsub.s32 0, %v203
  %v205 = vrot.slane %v200, %v204
  %vm207 = vcmask 523264
  %v209 = vsel %vm207, %v191, 0
  %211 = vmatprep.subr.mxu0 0.0
  %212 = vmatpush1.msra.mxu0 %v192
  %213 = vmatprep.subr.mxu0 0.0
  %214 = vmatpush1.msra.mxu0 %v193
  %215 = vmatprep.subr.mxu0 0.0
  %216 = vmatpush1.msra.mxu0 %v194
  %217 = vmatprep.subr.mxu0 0.0
  %218 = vmatpush1.msra.mxu0 %v195
  %219 = vmatprep.subr.mxu0 0.0
  %220 = vmatpush1.msra.mxu0 %v196
  %221 = vmatprep.subr.mxu0 0.0
  %222 = vmatpush1.msra.mxu0 %v197
  %223 = vmatprep.subr.mxu0 0.0
  %224 = vmatpush1.msra.mxu0 %v198
  %225 = vmatprep.subr.mxu0 0.0
  %226 = vmatpush1.msra.mxu0 %v199
  %227 = vmatprep.subr.mxu0 0.0
  %228 = vmatpush1.msra.mxu0 0.0
  %229 = vmatprep.subr.mxu0 0.0
  %230 = vmatpush1.msra.mxu0 0.0
  %231 = vmatprep.subr.mxu0 0.0
  %232 = vmatpush1.msra.mxu0 0.0
  %233 = vmatprep.subr.mxu0 0.0
  %234 = vmatpush1.msra.mxu0 0.0
  %235 = vmatprep.subr.mxu0 0.0
  %236 = vmatpush1.msra.mxu0 0.0
  %237 = vmatprep.subr.mxu0 0.0
  %238 = vmatpush1.msra.mxu0 0.0
  %239 = vmatprep.subr.mxu0 0.0
  %240 = vmatpush1.msra.mxu0 0.0
  %241 = vmatprep.subr.mxu0 0.0
  %242 = vmatpush1.msra.mxu0 0.0
  %243 = vmatprep.subr.mxu0 0.0
  %244 = vmatpush1.msra.mxu0 0.0
  %245 = vmatprep.subr.mxu0 0.0
  %246 = vmatpush1.msra.mxu0 0.0
  %247 = vmatprep.subr.mxu0 0.0
  %248 = vmatpush1.msra.mxu0 0.0
  %249 = vmatprep.subr.mxu0 0.0
  %250 = vmatpush1.msra.mxu0 0.0
  %251 = vmatprep.subr.mxu0 0.0
  %252 = vmatpush1.msra.mxu0 0.0
  %253 = vmatprep.subr.mxu0 0.0
  %254 = vmatpush1.msra.mxu0 0.0
  %255 = vmatprep.subr.mxu0 0.0
  %256 = vmatpush1.msra.mxu0 0.0
  %257 = vmatprep.subr.mxu0 0.0
  %258 = vmatpush1.msra.mxu0 0.0
  %259 = vmatprep.subr.mxu0 0.0
  %260 = vmatpush1.msra.mxu0 0.0
  %261 = vmatprep.subr.mxu0 0.0
  %262 = vmatpush1.msra.mxu0 0.0
  %263 = vmatprep.subr.mxu0 0.0
  %264 = vmatpush1.msra.mxu0 0.0
  %265 = vmatprep.subr.mxu0 0.0
  %266 = vmatpush1.msra.mxu0 0.0
  %267 = vmatprep.subr.mxu0 0.0
  %268 = vmatpush1.msra.mxu0 0.0
  %269 = vmatprep.subr.mxu0 0.0
  %270 = vmatpush1.msra.mxu0 0.0
  %271 = vmatprep.subr.mxu0 0.0
  %272 = vmatpush1.msra.mxu0 0.0
  %273 = vmatprep.subr.mxu0 0.0
  %274 = vmatpush1.msra.mxu0 0.0
  %275 = vmatprep.mubr.f32.mxu0 0.0
  %276 = vmatmul.mubr.f32.gmra.mrb[0].mxu0 %v209
  %v277 = vpop.f32.mrb[0].mxu0
  %v278 = vadd.f32 %v205, %v277
  %v279 = vpop.f32.mrb[0].mxu0
  %280 = vdwg.mxu0
  %vm281 = vcmask 7168
  %282 = vst.msk [vmem:[%s7] sm:$0xff] %vm281, %v278
  // Predicated region
  $region30: #{tpu_custom_call.1} parent=0 // pred_check
    _
  $region31: #{tpu_custom_call.1} parent=0 // pred_check_branch
    %284 = sbr.rel (0) target = $region33
  $region32: #{tpu_custom_call.1} parent=0 // pred_region
    _
  $region33: #{tpu_custom_call.1} parent=0 // pred_fallthru
    _
  // Predicated region
  $region34: #{tpu_custom_call.1} parent=0 // pred_check
    _
  $region35: #{tpu_custom_call.1} parent=0 // pred_check_branch
    %286 = sbr.rel (0) target = $region37
  $region36: #{tpu_custom_call.1} parent=0 // pred_region
    _
  $region37: #{tpu_custom_call.1} parent=0 // pred_fallthru
    _

</llo_original>
